<compile_context>
chip_gen: v6e
topology: v6e:2x2x1
jax: 0.10.0
libtpu: 0.0.40
codegen_flags: <defaults>
</compile_context>

<pallas_src>
import jax
import jax.numpy as jnp
from jax.experimental import pallas as pl
from jax.experimental.pallas import tpu as pltpu

LANE = 128                          # lane width; block spans full slab width
TARGET_BLOCK_BYTES = 2 * 1024 * 1024   # ~2 MiB per buffer (safe on v5e/v6e/v7x)
SINGLE_BLOCK_BYTES = 128 * 1024        # <= this -> single full-extent block


def _round_up(x, m):
    return ((x + m - 1) // m) * m


def mix_kernel(mix_ref, a_ref, b_ref, o_ref):
    # mix_ref: (1, 1) raw parameter; sigmoid computed in-kernel (EUP, free).
    m = mix_ref[...].astype(jnp.float32)          # (1, 1)
    sig = 1.0 / (1.0 + jnp.exp(-m))               # (1, 1), broadcasts below
    a = a_ref[...]
    b = b_ref[...]
    # b + sig*(a-b) == sig*a + (1-sig)*b, one mul + two adds, promoted to f32.
    o_ref[...] = (b + sig * (a - b)).astype(o_ref.dtype)


def mix_forward(mix, A, B):
    """sigmoid(mix)*A + (1-sigmoid(mix))*B for equal-shaped A, B."""
    assert A.shape == B.shape and A.dtype == B.dtype
    mix = jnp.asarray(mix)
    assert mix.size == 1, "Mix expects a single scalar mixing parameter"
    m2 = mix.reshape(1, 1).astype(jnp.float32)

    flat = A.size
    if flat == 0:
        return A

    if flat % LANE != 0:
        # Ragged path: exact-traffic fused XLA blend (no pad / slice copies).
        sig = 1.0 / (1.0 + jnp.exp(-m2[0, 0]))
        return (B + sig * (A - B)).astype(A.dtype)

    # Aligned path: lane-dense (rows, 128) slab; reshape is free (contiguous).
    rows = flat // LANE
    a2 = A.reshape(rows, LANE)
    b2 = B.reshape(rows, LANE)

    itemsize = A.dtype.itemsize
    total_bytes = flat * itemsize
    if total_bytes <= SINGLE_BLOCK_BYTES:
        # Tiny tensor: one full-extent block, zero per-step pipeline overhead.
        block_rows = rows
    else:
        # dtype-aware ~2 MiB blocks; cap so there are always >= 2 grid steps
        # (lets v7x shard the parallel axis across its two TensorCores).
        max_block_rows = max(64, TARGET_BLOCK_BYTES // (LANE * itemsize))
        block_rows = min(max_block_rows, _round_up(pl.cdiv(rows, 2), 64))
    grid = (pl.cdiv(rows, block_rows),)

    out = pl.pallas_call(
        mix_kernel,
        out_shape=jax.ShapeDtypeStruct((rows, LANE), A.dtype),
        grid=grid,
        in_specs=[
            pl.BlockSpec((1, 1), lambda i: (0, 0)),              # raw mix scalar
            pl.BlockSpec((block_rows, LANE), lambda i: (i, 0)),  # A tile
            pl.BlockSpec((block_rows, LANE), lambda i: (i, 0)),  # B tile
        ],
        out_specs=pl.BlockSpec((block_rows, LANE), lambda i: (i, 0)),
        compiler_params=pltpu.CompilerParams(
            dimension_semantics=("parallel",)),
    )(m2, a2, b2)

    return out.reshape(A.shape)


def _ref(mix, A, B):
    sig = jax.nn.sigmoid(jnp.asarray(mix).astype(jnp.float32).reshape(-1)[0])
    return (sig * A.astype(jnp.float32)
            + (1.0 - sig) * B.astype(jnp.float32)).astype(A.dtype)


if __name__ == "__main__":
    key = jax.random.PRNGKey(0)
    k_mix, k_a, k_b = jax.random.split(key, 3)

    # torch.rand((1,)) equivalent: U[0,1) scalar parameter.
    mix_param = jax.random.uniform(k_mix, (1,), dtype=jnp.float32)

    # --- main check: small NCHW tensors (single-block kernel path) ---
    A = jax.random.normal(k_a, (2, 4, 16, 16), dtype=jnp.float32)
    B = jax.random.normal(k_b, (2, 4, 16, 16), dtype=jnp.float32)
    out = jax.block_until_ready(mix_forward(mix_param, A, B))
    assert out.shape == A.shape and out.dtype == A.dtype
    assert jnp.allclose(out, _ref(mix_param, A, B), atol=1e-5, rtol=1e-5)

    # --- ragged size (not a multiple of 128): pad-free exact-traffic path ---
    A2 = jax.random.normal(k_a, (3, 5, 17, 19), dtype=jnp.float32)
    B2 = jax.random.normal(k_b, (3, 5, 17, 19), dtype=jnp.float32)
    out2 = jax.block_until_ready(mix_forward(mix_param, A2, B2))
    assert jnp.allclose(out2, _ref(mix_param, A2, B2), atol=1e-5, rtol=1e-5)

    # --- multi-block grid path with a partial trailing block ---
    A3 = jax.random.normal(k_a, (3, 200, 32, 32), dtype=jnp.float32)  # 4800 rows
    B3 = jax.random.normal(k_b, (3, 200, 32, 32), dtype=jnp.float32)
    out3 = jax.block_until_ready(mix_forward(mix_param, A3, B3))
    assert jnp.allclose(out3, _ref(mix_param, A3, B3), atol=1e-5, rtol=1e-5)

    # --- bf16 dtype path (in-kernel f32 promote + store cast) ---
    A4 = jax.random.normal(k_a, (2, 4, 16, 16), dtype=jnp.bfloat16)
    B4 = jax.random.normal(k_b, (2, 4, 16, 16), dtype=jnp.bfloat16)
    out4 = jax.block_until_ready(mix_forward(mix_param, A4, B4))
    assert out4.dtype == jnp.bfloat16
    assert jnp.allclose(out4.astype(jnp.float32),
                        _ref(mix_param, A4, B4).astype(jnp.float32),
                        atol=2e-2, rtol=2e-2)

    print("KERNEL_OK")
</pallas_src>

<mosaic_0001>
module attributes {stable_mosaic.version = 11 : i64} {
  func.func @mix_kernel(%arg0: i32, %arg1: memref<1x1xf32, #tpu.memory_space<vmem>>, %arg2: memref<16x128xf32, #tpu.memory_space<vmem>>, %arg3: memref<16x128xf32, #tpu.memory_space<vmem>>, %arg4: memref<16x128xf32, #tpu.memory_space<vmem>>) attributes {dimension_semantics = [#tpu.dimension_semantics<parallel>], iteration_bounds = array<i64: 1>, scalar_prefetch = 0 : i64, scratch_operands = 0 : i64, tpu.core_type = #tpu.core_type<tc>, window_params = [{pipeline_mode = #tpu.pipeline_mode<synchronous>, transform_indices = @transform_0, window_bounds = array<i64: 1, 1>}, {transform_indices = @transform_1, window_bounds = array<i64: 16, 128>}, {transform_indices = @transform_2, window_bounds = array<i64: 16, 128>}, {transform_indices = @transform_3, window_bounds = array<i64: 16, 128>}]} {
    %c0 = arith.constant 0 : index
    %c0_0 = arith.constant 0 : index
    %0 = vector.load %arg1[%c0, %c0_0] : memref<1x1xf32, #tpu.memory_space<vmem>>, vector<1x1xf32>
    %cst = arith.constant 0.000000e+00 : f32
    %1 = vector.broadcast %cst : f32 to vector<1x1xf32>
    %2 = arith.subf %1, %0 : vector<1x1xf32>
    %3 = math.exp %2 : vector<1x1xf32>
    %cst_1 = arith.constant 1.000000e+00 : f32
    %4 = vector.broadcast %cst_1 : f32 to vector<1x1xf32>
    %5 = arith.addf %4, %3 : vector<1x1xf32>
    %cst_2 = arith.constant 1.000000e+00 : f32
    %6 = vector.broadcast %cst_2 : f32 to vector<1x1xf32>
    %7 = arith.divf %6, %5 : vector<1x1xf32>
    %c0_3 = arith.constant 0 : index
    %c0_4 = arith.constant 0 : index
    %8 = vector.load %arg2[%c0_3, %c0_4] : memref<16x128xf32, #tpu.memory_space<vmem>>, vector<16x128xf32>
    %c0_5 = arith.constant 0 : index
    %c0_6 = arith.constant 0 : index
    %9 = vector.load %arg3[%c0_5, %c0_6] : memref<16x128xf32, #tpu.memory_space<vmem>>, vector<16x128xf32>
    %10 = arith.subf %8, %9 : vector<16x128xf32>
    %11 = vector.broadcast %7 : vector<1x1xf32> to vector<16x128xf32>
    %12 = arith.mulf %11, %10 : vector<16x128xf32>
    %13 = arith.addf %9, %12 : vector<16x128xf32>
    %c0_7 = arith.constant 0 : index
    %c0_8 = arith.constant 0 : index
    %14 = vector.load %arg4[%c0_7, %c0_8] : memref<16x128xf32, #tpu.memory_space<vmem>>, vector<16x128xf32>
    tpu.vector_store %arg4[%c0_7, %c0_8], %13 {strides = array<i32>} : memref<16x128xf32, #tpu.memory_space<vmem>>, vector<16x128xf32>,
    return
  }
  func.func @transform_0(%arg0: i32) -> (i32, i32) {
    %c0_i32 = arith.constant 0 : i32
    %c0_i32_0 = arith.constant 0 : i32
    %c0_i32_1 = arith.constant 0 : i32
    return %c0_i32, %c0_i32_0 : i32, i32
  }
  func.func @transform_1(%arg0: i32) -> (i32, i32) {
    %c0_i32 = arith.constant 0 : i32
    %c0_i32_0 = arith.constant 0 : i32
    return %arg0, %c0_i32 : i32, i32
  }
  func.func @transform_2(%arg0: i32) -> (i32, i32) {
    %c0_i32 = arith.constant 0 : i32
    %c0_i32_0 = arith.constant 0 : i32
    return %arg0, %c0_i32 : i32, i32
  }
  func.func @transform_3(%arg0: i32) -> (i32, i32) {
    %c0_i32 = arith.constant 0 : i32
    %c0_i32_0 = arith.constant 0 : i32
    return %arg0, %c0_i32 : i32, i32
  }
}

</mosaic_0001>

<llo_original>
// kernel: tpu_custom_call.1
$region0: #{tpu_custom_call.1}
  #allocation0 [shape = 'u32[]', space=smem, size = 0x4, offset = 0x4, fixed_abs, tag = 'smem constant byte address 0x4 - core index']
  #allocation1 [shape = 'u32[144,128]{1,0:T(1,128)}', space=vmem, size = 0x12000, scoped, tag = 'internal scratch']
  #allocation2 [shape = 'f32[1,1]{1,0:T(1,128)S(1)}', space=vmem, size = 0x200, scoped, tag = 'scoped memory for tpu_custom_call.1']
  %s0 = inlined_call_operand.<no memory space> [shape: f32[1,1], index: 0, kind: input, shape index: {}]
  %s1 = inlined_call_operand.hbm [shape: f32[16,128], index: 1, kind: input, shape index: {}]
  %s2 = inlined_call_operand.hbm [shape: f32[16,128], index: 2, kind: input, shape index: {}]
  %s3 = inlined_call_operand.hbm [shape: f32[16,128], index: 3, kind: output, shape index: {}]
  %s4 = sld [smem:[#allocation0]]
  $region30: #{tpu_custom_call.1} parent=0
    _
  %s6 = ssub.s32 1, %s4
  %s7 = scalar_select 0, %s6, %s4
  %v8 = vstv %s0
  %9 = vst [vmem:[#allocation2] sm:$0x1] %v8
  $region1: #{tpu_custom_call.1} parent=0
    #allocation3 [shape = 'u8[8192]{0}', space=vmem, size = 0x2000, scoped, tag = 'input window, operand 1, single buffered']
    #allocation4 [shape = 's32[1]{0}', space=sflag, size = 0x4, scoped, tag = 'scoped memory for tpu_custom_call.1']
    #allocation5 [shape = 's32[1]{0}', space=sflag, size = 0x4, scoped, tag = 'scoped memory for tpu_custom_call.1']
    #allocation6 [shape = 'u8[8192]{0}', space=vmem, size = 0x2000, scoped, tag = 'input window, operand 2, single buffered']
    #allocation7 [shape = 's32[1]{0}', space=sflag, size = 0x4, scoped, tag = 'scoped memory for tpu_custom_call.1']
    #allocation8 [shape = 'u8[8192]{0}', space=vmem, size = 0x2000, scoped, tag = 'output window, operand 0, single buffered']
    %10 = vsyncpa [#allocation4], 0
    %11 = vsyncpa [#allocation7], 0
    %12 = vsyncpa [#allocation5], 0
    // Predicated region
    $region2: #{tpu_custom_call.1} parent=1 // pred_check
      _
    $region3: #{tpu_custom_call.1} parent=1 // pred_check_branch
      %14 = sbr.rel (0) target = $region5
    $region4: #{tpu_custom_call.1} parent=1 // pred_region
      _
    $region5: #{tpu_custom_call.1} parent=1 // pred_fallthru
      _
    // Predicated region
    $region6: #{tpu_custom_call.1} parent=1 // pred_check
      _
    $region7: #{tpu_custom_call.1} parent=1 // pred_check_branch
      %16 = sbr.rel (0) target = $region9
    $region8: #{tpu_custom_call.1} parent=1 // pred_region
      %s18 = ssub.s32 256, 256
      %19 = vsyncadd [#allocation4], %s18
      %s20 = sshll.u32 [#allocation3], 4
      %s21 = int_to_ptr.vmem [resolvable:$true] %s20
      %26 = dma.hbm_to_vmem [thread:$0]  %s1, 256, %s21, [#allocation4], 128, 128, 8
    $region9: #{tpu_custom_call.1} parent=1 // pred_fallthru
      _
    // Predicated region
    $region10: #{tpu_custom_call.1} parent=1 // pred_check
      _
    $region11: #{tpu_custom_call.1} parent=1 // pred_check_branch
      %28 = sbr.rel (0) target = $region13
    $region12: #{tpu_custom_call.1} parent=1 // pred_region
      %s30 = ssub.s32 256, 256
      %31 = vsyncadd [#allocation7], %s30
      %s32 = sshll.u32 [#allocation6], 4
      %s33 = int_to_ptr.vmem [resolvable:$true] %s32
      %38 = dma.hbm_to_vmem [thread:$0]  %s2, 256, %s33, [#allocation7], 128, 128, 8
    $region13: #{tpu_custom_call.1} parent=1 // pred_fallthru
      _
    // Predicated region
    $region14: #{tpu_custom_call.1} parent=1 // pred_check
      _
    $region15: #{tpu_custom_call.1} parent=1 // pred_check_branch
      %40 = sbr.rel (0) target = $region17
    $region16: #{tpu_custom_call.1} parent=1 // pred_region
      %41 = dma.done [#allocation4], 256
    $region17: #{tpu_custom_call.1} parent=1 // pred_fallthru
      _
    // Predicated region
    $region18: #{tpu_custom_call.1} parent=1 // pred_check
      _
    $region19: #{tpu_custom_call.1} parent=1 // pred_check_branch
      %43 = sbr.rel (0) target = $region21
    $region20: #{tpu_custom_call.1} parent=1 // pred_region
      %44 = dma.done [#allocation7], 256
    $region21: #{tpu_custom_call.1} parent=1 // pred_fallthru
      _
    %v45 = vld [vmem:[#allocation2] sm:$0x1]
    %v46 = vsub.f32 0.0, %v45
    %v47 = vmul.f32 %v46, 1.442695
    %v48 = vpow.pop %v47
    %v49 = vadd.f32 %v48, 1.0
    %v50 = vrcp.pop %v49
    %v51 = vmul.f32 1.0, %v50
    %v52 = vld [vmem:[#allocation3] sm:$0xff]
    %v53 = vld [vmem:[#allocation3 + $0x8] sm:$0xff]
    %v54 = vld [vmem:[#allocation6] sm:$0xff]
    %v55 = vld [vmem:[#allocation6 + $0x8] sm:$0xff]
    %v56 = vsub.f32 %v52, %v54
    %v57 = vsub.f32 %v53, %v55
    %v59 = vlaneseq
    %v60 = vshrl.u32 %v59, 7
    %v61 = vsub.s32 0, %v60
    %v62 = vrot.slane %v51, %v61
    %63 = vset.pattern.permute.xlu0 0
    %64 = vperm.xlu0 %63, %v62
    %v65 = vpop.permute.xlu0 %64
    %v67 = vmul.f32 %v65, %v56
    %v68 = vmul.f32 %v65, %v57
    %v69 = vadd.f32 %v54, %v67
    %v70 = vadd.f32 %v55, %v68
    %71 = vst [vmem:[#allocation8] sm:$0xff] %v69
    %72 = vst [vmem:[#allocation8 + $0x8] sm:$0xff] %v70
    // Predicated region
    $region22: #{tpu_custom_call.1} parent=1 // pred_check
      _
    $region23: #{tpu_custom_call.1} parent=1 // pred_check_branch
      %74 = sbr.rel (0) target = $region25
    $region24: #{tpu_custom_call.1} parent=1 // pred_region
      %s76 = ssub.s32 256, 256
      %77 = vsyncadd [#allocation5], %s76
      %s78 = sshll.u32 [#allocation8], 4
      %s79 = int_to_ptr.vmem [resolvable:$true] %s78
      %84 = dma.vmem_to_hbm [thread:$0]  %s79, 256, %s3, [#allocation5], 128, 128, 8
    $region25: #{tpu_custom_call.1} parent=1 // pred_fallthru
      _
    // Predicated region
    $region26: #{tpu_custom_call.1} parent=1 // pred_check
      _
    $region27: #{tpu_custom_call.1} parent=1 // pred_check_branch
      %86 = sbr.rel (0) target = $region29
    $region28: #{tpu_custom_call.1} parent=1 // pred_region
      %87 = dma.done [#allocation5], 256
    $region29: #{tpu_custom_call.1} parent=1 // pred_fallthru
      _
    %88 = vsyncpa [#allocation4], 1
    %89 = vsyncpa [#allocation7], 1
    %90 = vsyncpa [#allocation5], 1

</llo_original>
